<compile_context>
chip_gen: v7x
topology: tpu7x:2x2x1
jax: 0.10.0
libtpu: 0.0.40
codegen_flags: <defaults>
</compile_context>

<pallas_src>
import functools

import jax
import jax.numpy as jnp
from jax.experimental import pallas as pl
from jax.experimental.pallas import tpu as pltpu


def _se_gate_kernel(gate_ref, x_ref, o_ref, *, tile_rows):
    # gate_ref: [rows_pad, 1]  (resident: constant block index -> one DMA)
    # x_ref / o_ref: [tile_rows, HW]
    r0 = pl.multiple_of(pl.program_id(0) * tile_rows, tile_rows)
    g = gate_ref[pl.ds(r0, tile_rows), :]
    # Sigmoid on the EUP in f32 (free slot here), a single cast, then a
    # broadcast multiply on the VPU in the feature map's native dtype.
    g = jax.nn.sigmoid(g.astype(jnp.float32)).astype(x_ref.dtype)
    o_ref[...] = (x_ref[...] * g).astype(o_ref.dtype)


def _pick_tile_rows(rows, cols, itemsize, *, target_grid=2,
                    vmem_budget_bytes=6 << 20):
    """Row-tile heuristic:
      * aim for `target_grid` equal tiles (grid=2 at rows=384 -> tr=192):
        one tile per TC on v7x, fewer fixed-cost grid steps on v5e/v6e;
      * cap so double-buffered in+out blocks (4 * tr * cols * itemsize) stay
        within a small VMEM budget on every generation.
    """
    if rows <= 8:
        return rows
    tr = -(-rows // target_grid)                    # ceil(rows / target_grid)
    tr = -(-tr // 8) * 8                            # sublane (8) aligned
    max_tr_by_vmem = max(8, (vmem_budget_bytes // (4 * cols * itemsize)) // 8 * 8)
    rows_up = -(-rows // 8) * 8
    return max(8, min(tr, max_tr_by_vmem, rows_up))


def sigmoid_mul(gate, x):
    """sigmoid(gate) * x with gate shape [N, C, 1, 1], x shape [N, C, H, W]."""
    N, C, H, W = x.shape
    assert gate.shape == (N, C, 1, 1)
    rows, cols = N * C, H * W

    x2 = x.reshape(rows, cols)          # lane-dense spatial axis
    g2 = gate.reshape(rows, 1)

    itemsize = jnp.dtype(x.dtype).itemsize
    tr = _pick_tile_rows(rows, cols, itemsize)
    grid = pl.cdiv(rows, tr)

    # Pad the (tiny, ~rows*4 B) gate so the in-kernel dynamic slice for a
    # partial tail tile never reads out of bounds; padded rows only ever feed
    # masked-out output rows.
    rows_pad = grid * tr
    if rows_pad != rows:
        g2 = jnp.pad(g2, ((0, rows_pad - rows), (0, 0)))

    cost = pl.CostEstimate(
        flops=rows * cols,                         # one multiply per element
        transcendentals=rows,                      # one sigmoid per channel
        bytes_accessed=(2 * rows * cols + rows) * itemsize,
    )

    out2 = pl.pallas_call(
        functools.partial(_se_gate_kernel, tile_rows=tr),
        out_shape=jax.ShapeDtypeStruct((rows, cols), x.dtype),
        grid_spec=pl.GridSpec(
            grid=(grid,),
            in_specs=[
                # Whole gate, constant block index -> DMA'd once, stays in VMEM.
                pl.BlockSpec((rows_pad, 1), lambda i: (0, 0)),
                # Feature rows, double-buffered per tile.
                pl.BlockSpec((tr, cols), lambda i: (i, 0)),
            ],
            out_specs=pl.BlockSpec((tr, cols), lambda i: (i, 0)),
        ),
        compiler_params=pltpu.CompilerParams(
            dimension_semantics=("parallel",)),
        cost_estimate=cost,
    )(g2, x2)

    return out2.reshape(N, C, H, W)


if __name__ == "__main__":
    key = jax.random.PRNGKey(0)
    k1, k2 = jax.random.split(key)

    # Small shapes consistent with the module's broadcasting pattern.
    N, C, H, W = 2, 4, 16, 16
    x186 = jax.random.normal(k1, (N, C, H, W), dtype=jnp.float32)   # features
    x190 = jax.random.normal(k2, (N, C, 1, 1), dtype=jnp.float32)   # SE gate

    out = jax.block_until_ready(sigmoid_mul(x190, x186))
    ref = jax.nn.sigmoid(x190) * x186
    assert out.shape == (N, C, H, W)
    assert jnp.allclose(out, ref, atol=1e-5, rtol=1e-5)

    # Also exercise the multi-tile path at the original module shape
    # [1, 384, 28, 28]  (rows=384 -> tr=192, grid=2: one tile per v7x TC).
    k3, k4 = jax.random.split(k1)
    xb = jax.random.normal(k3, (1, 384, 28, 28), dtype=jnp.float32)
    gb = jax.random.normal(k4, (1, 384, 1, 1), dtype=jnp.float32)
    outb = jax.block_until_ready(sigmoid_mul(gb, xb))
    refb = jax.nn.sigmoid(gb) * xb
    assert jnp.allclose(outb, refb, atol=1e-5, rtol=1e-5)

    print("KERNEL_OK")
</pallas_src>

<mosaic_0001>
module attributes {stable_mosaic.version = 11 : i64} {
  func.func @_se_gate_kernel(%arg0: i32, %arg1: memref<8x1xf32, #tpu.memory_space<vmem>>, %arg2: memref<8x256xf32, #tpu.memory_space<vmem>>, %arg3: memref<8x256xf32, #tpu.memory_space<vmem>>) attributes {dimension_semantics = [#tpu.dimension_semantics<parallel>], iteration_bounds = array<i64: 1>, scalar_prefetch = 0 : i64, scratch_operands = 0 : i64, tpu.core_type = #tpu.core_type<tc>, window_params = [{pipeline_mode = #tpu.pipeline_mode<synchronous>, transform_indices = @transform_0, window_bounds = array<i64: 8, 1>}, {transform_indices = @transform_1, window_bounds = array<i64: 8, 256>}, {transform_indices = @transform_2, window_bounds = array<i64: 8, 256>}]} {
    %c8_i32 = arith.constant 8 : i32
    %0 = arith.muli %arg0, %c8_i32 : i32
    %1 = tpu.assume_multiple %0, 8 : i32
    %2 = arith.index_cast %1 : i32 to index
    %c0 = arith.constant 0 : index
    %3 = vector.load %arg1[%2, %c0] : memref<8x1xf32, #tpu.memory_space<vmem>>, vector<8x1xf32>
    %4 = arith.negf %3 : vector<8x1xf32>
    %5 = math.exp %4 : vector<8x1xf32>
    %cst = arith.constant 1.000000e+00 : f32
    %6 = vector.broadcast %cst : f32 to vector<8x1xf32>
    %7 = arith.addf %6, %5 : vector<8x1xf32>
    %8 = arith.divf %6, %7 : vector<8x1xf32>
    %c0_0 = arith.constant 0 : index
    %c0_1 = arith.constant 0 : index
    %9 = vector.load %arg2[%c0_0, %c0_1] : memref<8x256xf32, #tpu.memory_space<vmem>>, vector<8x256xf32>
    %10 = vector.broadcast %8 : vector<8x1xf32> to vector<8x256xf32>
    %11 = arith.mulf %9, %10 : vector<8x256xf32>
    %c0_2 = arith.constant 0 : index
    %c0_3 = arith.constant 0 : index
    %12 = vector.load %arg3[%c0_2, %c0_3] : memref<8x256xf32, #tpu.memory_space<vmem>>, vector<8x256xf32>
    tpu.vector_store %arg3[%c0_2, %c0_3], %11 {strides = array<i32>} : memref<8x256xf32, #tpu.memory_space<vmem>>, vector<8x256xf32>,
    return
  }
  func.func @transform_0(%arg0: i32) -> (i32, i32) {
    %c0_i32 = arith.constant 0 : i32
    %c0_i32_0 = arith.constant 0 : i32
    %c0_i32_1 = arith.constant 0 : i32
    return %c0_i32, %c0_i32_0 : i32, i32
  }
  func.func @transform_1(%arg0: i32) -> (i32, i32) {
    %c0_i32 = arith.constant 0 : i32
    %c0_i32_0 = arith.constant 0 : i32
    return %arg0, %c0_i32 : i32, i32
  }
  func.func @transform_2(%arg0: i32) -> (i32, i32) {
    %c0_i32 = arith.constant 0 : i32
    %c0_i32_0 = arith.constant 0 : i32
    return %arg0, %c0_i32 : i32, i32
  }
}

</mosaic_0001>

<llo_original>
// kernel: tpu_custom_call.1
$region0: #{tpu_custom_call.1}
  #allocation0 [shape = 'u32[]', space=smem, size = 0x4, offset = 0x4, fixed_abs, tag = 'smem constant byte address 0x4 - core index']
  #allocation1 [shape = 'u32[144,128]{1,0:T(1,128)}', space=vmem, size = 0x12000, scoped, tag = 'internal scratch']
  %s0 = inlined_call_operand.vmem [shape: f32[8,1], index: 0, kind: input, shape index: {}]
  %s1 = inlined_call_operand.hbm [shape: f32[8,256], index: 1, kind: input, shape index: {}]
  %s2 = inlined_call_operand.hbm [shape: f32[8,256], index: 2, kind: output, shape index: {}]
  %s3 = sld [smem:[#allocation0]]
  $region22: #{tpu_custom_call.1} parent=0
    _
  %s5 = ssub.s32 1, %s3
  %s6 = scalar_select 0, %s5, %s3
  $region1: #{tpu_custom_call.1} parent=0
    #allocation2 [shape = 'u8[8192]{0}', space=vmem, size = 0x2000, scoped, tag = 'input window, operand 1, single buffered']
    #allocation3 [shape = 's32[1]{0}', space=sflag, size = 0x4, scoped, tag = 'scoped memory for tpu_custom_call.1']
    #allocation4 [shape = 's32[1]{0}', space=sflag, size = 0x4, scoped, tag = 'scoped memory for tpu_custom_call.1']
    #allocation5 [shape = 'u8[8192]{0}', space=vmem, size = 0x2000, scoped, tag = 'output window, operand 0, single buffered']
    %7 = vsyncpa [#allocation3], 0
    %8 = vsyncpa [#allocation4], 0
    // Predicated region
    $region2: #{tpu_custom_call.1} parent=1 // pred_check
      _
    $region3: #{tpu_custom_call.1} parent=1 // pred_check_branch
      %10 = sbr.rel (0) target = $region5
    $region4: #{tpu_custom_call.1} parent=1 // pred_region
      _
    $region5: #{tpu_custom_call.1} parent=1 // pred_fallthru
      _
    // Predicated region
    $region6: #{tpu_custom_call.1} parent=1 // pred_check
      _
    $region7: #{tpu_custom_call.1} parent=1 // pred_check_branch
      %12 = sbr.rel (0) target = $region9
    $region8: #{tpu_custom_call.1} parent=1 // pred_region
      %s14 = ssub.s32 256, 256
      %15 = vsyncadd [#allocation3], %s14
      %s17 = sshll.u32 [#allocation2], 4
      %s18 = int_to_ptr.vmem [resolvable:$true] %s17
      %20 = dma.hbm_to_vmem [thread:$0]  %s1, 256, %s18, [#allocation3]
    $region9: #{tpu_custom_call.1} parent=1 // pred_fallthru
      _
    // Predicated region
    $region10: #{tpu_custom_call.1} parent=1 // pred_check
      _
    $region11: #{tpu_custom_call.1} parent=1 // pred_check_branch
      %22 = sbr.rel (0) target = $region13
    $region12: #{tpu_custom_call.1} parent=1 // pred_region
      %23 = dma.done [#allocation3], 256
    $region13: #{tpu_custom_call.1} parent=1 // pred_fallthru
      _
    %s24 = smul.u32 0, 8
    %s25 = scalar_lea.vmem %s0, %s24
    %v26 = vld [vmem:[%s25] sm:$0xff]
    %v27 = vxor.u32 %v26, 2147483648
    %v28 = vmul.f32 %v27, 1.442695
    %v29 = vpow.pop %v28
    %v30 = vadd.f32 %v29, 1.0
    %v31 = vrcp.pop %v30
    %v32 = vmul.f32 1.0, %v31
    %v33 = vld [vmem:[#allocation2] sm:$0xff]
    %v34 = vld [vmem:[#allocation2 + $0x8] sm:$0xff]
    %36 = vset.pattern.permute.xlu0 0
    %37 = vperm.xlu0 %36, %v32
    %v38 = vpop.permute.xlu0 %37
    %v40 = vmul.f32 %v33, %v38
    %v41 = vmul.f32 %v34, %v38
    %42 = vst [vmem:[#allocation5] sm:$0xff] %v40
    %43 = vst [vmem:[#allocation5 + $0x8] sm:$0xff] %v41
    // Predicated region
    $region14: #{tpu_custom_call.1} parent=1 // pred_check
      _
    $region15: #{tpu_custom_call.1} parent=1 // pred_check_branch
      %45 = sbr.rel (0) target = $region17
    $region16: #{tpu_custom_call.1} parent=1 // pred_region
      %s47 = ssub.s32 256, 256
      %48 = vsyncadd [#allocation4], %s47
      %s50 = sshll.u32 [#allocation5], 4
      %s51 = int_to_ptr.vmem [resolvable:$true] %s50
      %53 = dma.vmem_to_hbm [thread:$0]  %s51, 256, %s2, [#allocation4]
    $region17: #{tpu_custom_call.1} parent=1 // pred_fallthru
      _
    // Predicated region
    $region18: #{tpu_custom_call.1} parent=1 // pred_check
      _
    $region19: #{tpu_custom_call.1} parent=1 // pred_check_branch
      %55 = sbr.rel (0) target = $region21
    $region20: #{tpu_custom_call.1} parent=1 // pred_region
      %56 = dma.done [#allocation4], 256
    $region21: #{tpu_custom_call.1} parent=1 // pred_fallthru
      _
    %57 = vsyncpa [#allocation3], 1
    %58 = vsyncpa [#allocation4], 1

</llo_original>
